<compile_context>
chip_gen: v7x
topology: tpu7x:2x2x1
jax: 0.10.0
libtpu: 0.0.40
codegen_flags: <defaults>
</compile_context>

<pallas_src>
import jax
import jax.numpy as jnp
from jax.experimental import pallas as pl
from jax.experimental.pallas import tpu as pltpu  # noqa: F401  (kept for TPU-specific tuning)

BN_EPS = 1e-5
LANE = 128


def _round_up(n, m):
    return ((n + m - 1) // m) * m


def linear_mapping_kernel(x_ref, p_ref, w_ref, o_ref):
    """Single-block kernel: BN(train) -> ReLU -> Linear -> ReLU -> Linear.

    x_ref : (B, F)        F = 2*D
    p_ref : (4, Pw)       row0 = gamma (F valid), row1 = beta (F valid),
                          row2 = b1 zero-padded to Dp, row3 = b2 zero-padded to Dp
    w_ref : (F + Dp, Dp)  rows [0, F)      = w1 zero-padded on output axis,
                          rows [F, F + Dp) = w2 zero-padded on both axes
    o_ref : (B, Dp)       lane-dense output (Dp is a multiple of 128)
    """
    x = x_ref[...]                                      # (B, F) f32
    B, F = x_ref.shape
    Dp = w_ref.shape[1]

    gamma = p_ref[0:1, :F]                              # (1, F)
    beta = p_ref[1:2, :F]                               # (1, F)
    b1 = p_ref[2:3, :Dp]                                # (1, Dp), zero past D
    b2 = p_ref[3:4, :Dp]                                # (1, Dp), zero past D

    # --- BatchNorm1d, training-mode batch stats (one pass: E[x], E[x^2]) ---
    inv_b = jnp.float32(1.0 / B)
    mean = jnp.sum(x, axis=0, keepdims=True) * inv_b    # (1, F)
    ex2 = jnp.sum(x * x, axis=0, keepdims=True) * inv_b
    var = ex2 - mean * mean                             # biased variance
    scale = gamma * jax.lax.rsqrt(var + BN_EPS)         # (1, F)
    h = (x - mean) * scale + beta                       # (B, F)

    # --- ReLU ---
    h = jnp.maximum(h, 0.0)

    # --- Linear(F -> D), padded to Dp lanes, + ReLU ---
    w1 = w_ref[0:F, :]                                  # (F, Dp)
    h = jnp.dot(h, w1, preferred_element_type=jnp.float32) + b1
    h = jnp.maximum(h, 0.0)                             # (B, Dp); cols >= D are 0

    # --- Linear(D -> D), padded to Dp lanes ---
    w2 = w_ref[F:, :]                                   # (Dp, Dp)
    y = jnp.dot(h, w2, preferred_element_type=jnp.float32) + b2
    o_ref[...] = y.astype(o_ref.dtype)                  # unmasked full-lane store


def pack_linear_mapping_params(gamma, beta, w1, b1, w2, b2):
    """One-time packing of all parameters into two lane-aligned arrays.

    Returns (params, w_packed):
      params   : (4, Pw)        Pw = max(2*D, round_up(D, 128))
      w_packed : (2*D + Dp, Dp) Dp = round_up(D, 128)
    """
    F, D = w1.shape                       # F = 2*D
    Dp = _round_up(D, LANE)
    Pw = max(F, Dp)

    params = jnp.zeros((4, Pw), jnp.float32)
    params = params.at[0, :F].set(gamma.reshape(-1).astype(jnp.float32))
    params = params.at[1, :F].set(beta.reshape(-1).astype(jnp.float32))
    params = params.at[2, :D].set(b1.reshape(-1).astype(jnp.float32))
    params = params.at[3, :D].set(b2.reshape(-1).astype(jnp.float32))

    w_packed = jnp.zeros((F + Dp, Dp), jnp.float32)
    w_packed = w_packed.at[:F, :D].set(w1.astype(jnp.float32))
    w_packed = w_packed.at[F:F + D, :D].set(w2.astype(jnp.float32))
    return params, w_packed


def linear_mapping(x0, params, w_packed, d_out):
    """x0: (B, 2*D) f32; params/w_packed from pack_linear_mapping_params.

    Returns (B, d_out) f32.
    """
    B, F = x0.shape
    Dp = w_packed.shape[1]
    # No grid: at B=8, D=32 everything fits in a fraction of one VMEM tile set,
    # so a single-block launch minimizes fixed overhead (3 input DMAs total).
    # For large B / repeated invocations, grid over B (weights with a constant
    # index_map stay VMEM-resident) and mark that axis "parallel" so v7x can
    # shard it across its two TensorCores; BN then needs a two-pass structure.
    out = pl.pallas_call(
        linear_mapping_kernel,
        out_shape=jax.ShapeDtypeStruct((B, Dp), jnp.float32),
        in_specs=[
            pl.BlockSpec(x0.shape, lambda: (0, 0)),
            pl.BlockSpec(params.shape, lambda: (0, 0)),
            pl.BlockSpec(w_packed.shape, lambda: (0, 0)),
        ],
        out_specs=pl.BlockSpec((B, Dp), lambda: (0, 0)),
    )(x0, params, w_packed)
    return out[:, :d_out]                 # drop the lane padding (layout plumbing)


def reference(x0, gamma, beta, w1, b1, w2, b2):
    x0 = x0.astype(jnp.float32)
    mean = jnp.mean(x0, axis=0, keepdims=True)
    var = jnp.mean((x0 - mean) ** 2, axis=0, keepdims=True)
    h = (x0 - mean) / jnp.sqrt(var + BN_EPS) * gamma + beta
    h = jnp.maximum(h, 0.0)
    h = h @ w1 + b1
    h = jnp.maximum(h, 0.0)
    return h @ w2 + b2


if __name__ == "__main__":
    # Small shapes consistent with the module: image_embed_dim D = 32, batch = 8.
    B, D = 8, 32
    F_in = 2 * D

    key = jax.random.PRNGKey(0)
    kx0, kx1, kw1, kb1, kw2, kb2 = jax.random.split(key, 6)

    # The module's forward indexes x[0]; build x as a tuple of two tensors.
    x = (jax.random.normal(kx0, (B, F_in), jnp.float32),
         jax.random.normal(kx1, (B, F_in), jnp.float32))

    # Deterministic parameter init.
    # BatchNorm1d affine params: gamma = 1, beta = 0 (PyTorch defaults).
    gamma = jnp.ones((1, F_in), jnp.float32)
    beta = jnp.zeros((1, F_in), jnp.float32)
    # Linear layers: uniform(-1/sqrt(fan_in), 1/sqrt(fan_in)), stored as (in, out).
    lim1 = 1.0 / (F_in ** 0.5)
    w1 = jax.random.uniform(kw1, (F_in, D), jnp.float32, -lim1, lim1)
    b1 = jax.random.uniform(kb1, (1, D), jnp.float32, -lim1, lim1)
    lim2 = 1.0 / (D ** 0.5)
    w2 = jax.random.uniform(kw2, (D, D), jnp.float32, -lim2, lim2)
    b2 = jax.random.uniform(kb2, (1, D), jnp.float32, -lim2, lim2)

    # One-time parameter packing (would be done once at model load time).
    params, w_packed = pack_linear_mapping_params(gamma, beta, w1, b1, w2, b2)
    params = jax.block_until_ready(params)
    w_packed = jax.block_until_ready(w_packed)

    out = linear_mapping(x[0], params, w_packed, D)
    out = jax.block_until_ready(out)

    ref = reference(x[0], gamma, beta, w1, b1, w2, b2)
    assert out.shape == (B, D)
    assert jnp.allclose(out, ref, atol=1e-4, rtol=1e-4), "mismatch vs reference"

    print("KERNEL_OK")
</pallas_src>

<mosaic_0001>
module attributes {stable_mosaic.version = 11 : i64} {
  func.func @linear_mapping_kernel(%arg0: memref<8x64xf32, #tpu.memory_space<vmem>>, %arg1: memref<4x128xf32, #tpu.memory_space<vmem>>, %arg2: memref<192x128xf32, #tpu.memory_space<vmem>>, %arg3: memref<8x128xf32, #tpu.memory_space<vmem>>) attributes {dimension_semantics = [], scalar_prefetch = 0 : i64, scratch_operands = 0 : i64, tpu.core_type = #tpu.core_type<tc>} {
    %c0 = arith.constant 0 : index
    %c0_0 = arith.constant 0 : index
    %0 = vector.load %arg0[%c0, %c0_0] : memref<8x64xf32, #tpu.memory_space<vmem>>, vector<8x64xf32>
    %c0_1 = arith.constant 0 : index
    %c0_2 = arith.constant 0 : index
    %1 = vector.load %arg1[%c0_1, %c0_2] : memref<4x128xf32, #tpu.memory_space<vmem>>, vector<1x64xf32>
    %c1 = arith.constant 1 : index
    %c0_3 = arith.constant 0 : index
    %2 = vector.load %arg1[%c1, %c0_3] : memref<4x128xf32, #tpu.memory_space<vmem>>, vector<1x64xf32>
    %c2 = arith.constant 2 : index
    %c0_4 = arith.constant 0 : index
    %3 = vector.load %arg1[%c2, %c0_4] : memref<4x128xf32, #tpu.memory_space<vmem>>, vector<1x128xf32>
    %c3 = arith.constant 3 : index
    %c0_5 = arith.constant 0 : index
    %4 = vector.load %arg1[%c3, %c0_5] : memref<4x128xf32, #tpu.memory_space<vmem>>, vector<1x128xf32>
    %cst = arith.constant dense<0.000000e+00> : vector<64xf32>
    %5 = vector.multi_reduction <add>, %0, %cst [0] : vector<8x64xf32> to vector<64xf32>
    %6 = vector.shape_cast %5 : vector<64xf32> to vector<1x64xf32>
    %cst_6 = arith.constant 1.250000e-01 : f32
    %7 = vector.broadcast %cst_6 : f32 to vector<1x64xf32>
    %8 = arith.mulf %6, %7 : vector<1x64xf32>
    %9 = arith.mulf %0, %0 : vector<8x64xf32>
    %cst_7 = arith.constant dense<0.000000e+00> : vector<64xf32>
    %10 = vector.multi_reduction <add>, %9, %cst_7 [0] : vector<8x64xf32> to vector<64xf32>
    %11 = vector.shape_cast %10 : vector<64xf32> to vector<1x64xf32>
    %cst_8 = arith.constant 1.250000e-01 : f32
    %12 = vector.broadcast %cst_8 : f32 to vector<1x64xf32>
    %13 = arith.mulf %11, %12 : vector<1x64xf32>
    %14 = arith.mulf %8, %8 : vector<1x64xf32>
    %15 = arith.subf %13, %14 : vector<1x64xf32>
    %cst_9 = arith.constant 9.99999974E-6 : f32
    %16 = vector.broadcast %cst_9 : f32 to vector<1x64xf32>
    %17 = arith.addf %15, %16 : vector<1x64xf32>
    %18 = math.rsqrt %17 : vector<1x64xf32>
    %19 = arith.mulf %1, %18 : vector<1x64xf32>
    %20 = vector.broadcast %8 : vector<1x64xf32> to vector<8x64xf32>
    %21 = arith.subf %0, %20 : vector<8x64xf32>
    %22 = vector.broadcast %19 : vector<1x64xf32> to vector<8x64xf32>
    %23 = arith.mulf %21, %22 : vector<8x64xf32>
    %24 = vector.broadcast %2 : vector<1x64xf32> to vector<8x64xf32>
    %25 = arith.addf %23, %24 : vector<8x64xf32>
    %cst_10 = arith.constant 0.000000e+00 : f32
    %26 = vector.broadcast %cst_10 : f32 to vector<8x64xf32>
    %27 = arith.maximumf %25, %26 : vector<8x64xf32>
    %c0_11 = arith.constant 0 : index
    %c0_12 = arith.constant 0 : index
    %28 = vector.load %arg2[%c0_11, %c0_12] : memref<192x128xf32, #tpu.memory_space<vmem>>, vector<64x128xf32>
    %cst_13 = arith.constant dense<0.000000e+00> : vector<8x128xf32>
    %29 = tpu.matmul %27, %28, %cst_13 {dimension_numbers = #tpu.dot_dimension_numbers<[1], [0], [0], [1], [0, 0, 1, 1], [], []>} : vector<8x64xf32>, vector<64x128xf32>, vector<8x128xf32> -> vector<8x128xf32>
    %30 = vector.broadcast %3 : vector<1x128xf32> to vector<8x128xf32>
    %31 = arith.addf %29, %30 : vector<8x128xf32>
    %cst_14 = arith.constant 0.000000e+00 : f32
    %32 = vector.broadcast %cst_14 : f32 to vector<8x128xf32>
    %33 = arith.maximumf %31, %32 : vector<8x128xf32>
    %c64 = arith.constant 64 : index
    %c0_15 = arith.constant 0 : index
    %34 = vector.load %arg2[%c64, %c0_15] : memref<192x128xf32, #tpu.memory_space<vmem>>, vector<128x128xf32>
    %cst_16 = arith.constant dense<0.000000e+00> : vector<8x128xf32>
    %35 = tpu.matmul %33, %34, %cst_16 {dimension_numbers = #tpu.dot_dimension_numbers<[1], [0], [0], [1], [0, 0, 1, 1], [], []>} : vector<8x128xf32>, vector<128x128xf32>, vector<8x128xf32> -> vector<8x128xf32>
    %36 = vector.broadcast %4 : vector<1x128xf32> to vector<8x128xf32>
    %37 = arith.addf %35, %36 : vector<8x128xf32>
    %c0_17 = arith.constant 0 : index
    %c0_18 = arith.constant 0 : index
    %38 = vector.load %arg3[%c0_17, %c0_18] : memref<8x128xf32, #tpu.memory_space<vmem>>, vector<8x128xf32>
    tpu.vector_store %arg3[%c0_17, %c0_18], %37 {strides = array<i32>} : memref<8x128xf32, #tpu.memory_space<vmem>>, vector<8x128xf32>,
    return
  }
}

</mosaic_0001>

<llo_original>
// kernel: tpu_custom_call.1
$region0: #{tpu_custom_call.1}
  #allocation0 [shape = 'u32[]', space=smem, size = 0x4, offset = 0x4, fixed_abs, tag = 'smem constant byte address 0x4 - core index']
  #allocation1 [shape = 'u32[144,128]{1,0:T(1,128)}', space=vmem, size = 0x12000, scoped, tag = 'internal scratch']
  %s0 = inlined_call_operand.hbm [shape: f32[8,64], index: 0, kind: input, shape index: {}]
  %s1 = inlined_call_operand.hbm [shape: f32[4,128], index: 1, kind: input, shape index: {}]
  %s2 = inlined_call_operand.hbm [shape: f32[192,128], index: 2, kind: input, shape index: {}]
  %s3 = inlined_call_operand.hbm [shape: f32[8,128], index: 3, kind: output, shape index: {}]
  %s4 = sld [smem:[#allocation0]]
  $region34: #{tpu_custom_call.1} parent=0
    _
  %s6 = ssub.s32 1, %s4
  %s7 = scalar_select 0, %s6, %s4
  $region1: #{tpu_custom_call.1} parent=0
    #allocation2 [shape = 'u8[4096]{0}', space=vmem, size = 0x1000, scoped, tag = 'input window, operand 0, single buffered']
    #allocation3 [shape = 's32[1]{0}', space=sflag, size = 0x4, scoped, tag = 'scoped memory for tpu_custom_call.1']
    #allocation4 [shape = 's32[1]{0}', space=sflag, size = 0x4, scoped, tag = 'scoped memory for tpu_custom_call.1']
    #allocation5 [shape = 'u8[2048]{0}', space=vmem, size = 0x800, scoped, tag = 'input window, operand 1, single buffered']
    #allocation6 [shape = 's32[1]{0}', space=sflag, size = 0x4, scoped, tag = 'scoped memory for tpu_custom_call.1']
    #allocation7 [shape = 'u8[98304]{0}', space=vmem, size = 0x18000, scoped, tag = 'input window, operand 2, single buffered']
    #allocation8 [shape = 'u8[4096]{0}', space=vmem, size = 0x1000, scoped, tag = 'output window, operand 0, single buffered']
    %8 = vsyncpa [#allocation3], 0
    %9 = vsyncpa [#allocation6], 0
    %10 = vsyncpa [#allocation4], 0
    // Predicated region
    $region2: #{tpu_custom_call.1} parent=1 // pred_check
      _
    $region3: #{tpu_custom_call.1} parent=1 // pred_check_branch
      %12 = sbr.rel (0) target = $region5
    $region4: #{tpu_custom_call.1} parent=1 // pred_region
      %s14 = ssub.s32 128, 128
      %15 = vsyncadd [#allocation3], %s14
      %s17 = sshll.u32 [#allocation2], 4
      %s18 = int_to_ptr.vmem [resolvable:$true] %s17
      %20 = dma.hbm_to_vmem [thread:$0]  %s0, 128, %s18, [#allocation3]
    $region5: #{tpu_custom_call.1} parent=1 // pred_fallthru
      _
    // Predicated region
    $region6: #{tpu_custom_call.1} parent=1 // pred_check
      _
    $region7: #{tpu_custom_call.1} parent=1 // pred_check_branch
      %22 = sbr.rel (0) target = $region9
    $region8: #{tpu_custom_call.1} parent=1 // pred_region
      %s24 = ssub.s32 64, 64
      %25 = vsyncadd [#allocation6], %s24
      %s27 = sshll.u32 [#allocation5], 4
      %s28 = int_to_ptr.vmem [resolvable:$true] %s27
      %30 = dma.hbm_to_vmem [thread:$0]  %s1, 64, %s28, [#allocation6]
    $region9: #{tpu_custom_call.1} parent=1 // pred_fallthru
      _
    // Predicated region
    $region10: #{tpu_custom_call.1} parent=1 // pred_check
      _
    $region11: #{tpu_custom_call.1} parent=1 // pred_check_branch
      %32 = sbr.rel (0) target = $region13
    $region12: #{tpu_custom_call.1} parent=1 // pred_region
      %s34 = ssub.s32 3072, 3072
      %35 = vsyncadd [#allocation6], %s34
      %s36 = sshll.u32 [#allocation7], 4
      %s37 = int_to_ptr.vmem [resolvable:$true] %s36
      %42 = dma.hbm_to_vmem [thread:$0]  %s2, 3072, %s37, [#allocation6], 128, 128, 8
    $region13: #{tpu_custom_call.1} parent=1 // pred_fallthru
      _
    // Predicated region
    $region14: #{tpu_custom_call.1} parent=1 // pred_check
      _
    $region15: #{tpu_custom_call.1} parent=1 // pred_check_branch
      %44 = sbr.rel (0) target = $region17
    $region16: #{tpu_custom_call.1} parent=1 // pred_region
      %45 = dma.done [#allocation3], 128
    $region17: #{tpu_custom_call.1} parent=1 // pred_fallthru
      _
    // Predicated region
    $region18: #{tpu_custom_call.1} parent=1 // pred_check
      _
    $region19: #{tpu_custom_call.1} parent=1 // pred_check_branch
      %47 = sbr.rel (0) target = $region21
    $region20: #{tpu_custom_call.1} parent=1 // pred_region
      %48 = dma.done [#allocation6], 64
    $region21: #{tpu_custom_call.1} parent=1 // pred_fallthru
      _
    // Predicated region
    $region22: #{tpu_custom_call.1} parent=1 // pred_check
      _
    $region23: #{tpu_custom_call.1} parent=1 // pred_check_branch
      %50 = sbr.rel (0) target = $region25
    $region24: #{tpu_custom_call.1} parent=1 // pred_region
      %51 = dma.done [#allocation6], 3072
    $region25: #{tpu_custom_call.1} parent=1 // pred_fallthru
      _
    %v52 = vld [vmem:[#allocation2] sm:$0xff]
    %v53 = vld [vmem:[#allocation5] sm:$0x1]
    %v54 = vld [vmem:[#allocation5 + $0x1] sm:$0x1]
    %v55 = vld [vmem:[#allocation5 + $0x2] sm:$0x1]
    %v56 = vld [vmem:[#allocation5 + $0x3] sm:$0x1]
    %vm57 = vcmask 523264
    %v58 = vsel %vm57, %v52, 0.0
    %v59 = vrot.slane %v58, 4
    %v60 = vadd.f32 %v58, %v59
    %v61 = vrot.slane %v60, 2
    %v62 = vadd.f32 %v60, %v61
    %v63 = vrot.slane %v62, 1
    %v64 = vadd.f32 %v62, %v63
    %v65 = vmul.f32 %v64, 0.125
    %v66 = vmul.f32 %v52, %v52
    %v67 = vsel %vm57, %v66, 0.0
    %v68 = vrot.slane %v67, 4
    %v69 = vadd.f32 %v67, %v68
    %v70 = vrot.slane %v69, 2
    %v71 = vadd.f32 %v69, %v70
    %v72 = vrot.slane %v71, 1
    %v73 = vadd.f32 %v71, %v72
    %v74 = vmul.f32 %v73, 0.125
    %v75 = vmul.f32 %v65, %v65
    %v76 = vsub.f32 %v74, %v75
    %v77 = vadd.f32 %v76, 1e-05
    %v78 = vrsqrt.pop %v77
    %v79 = vmul.f32 %v53, %v78
    %v80 = vsub.f32 %v52, %v65
    %v81 = vlaneseq
    %v82 = vshrl.u32 %v81, 7
    %v83 = vsub.s32 0, %v82
    %v84 = vrot.slane %v79, %v83
    %v85 = vmul.f32 %v80, %v84
    %v86 = vlaneseq
    %v87 = vshrl.u32 %v86, 7
    %v88 = vsub.s32 0, %v87
    %v89 = vrot.slane %v54, %v88
    %v90 = vadd.f32 %v85, %v89
    %v91 = vmax.f32 %v90, 0.0
    %v92 = vld [vmem:[#allocation7] sm:$0xff]
    %v93 = vld [vmem:[#allocation7 + $0x8] sm:$0xff]
    %v94 = vld [vmem:[#allocation7 + $0x10] sm:$0xff]
    %v95 = vld [vmem:[#allocation7 + $0x18] sm:$0xff]
    %v96 = vld [vmem:[#allocation7 + $0x20] sm:$0xff]
    %v97 = vld [vmem:[#allocation7 + $0x28] sm:$0xff]
    %v98 = vld [vmem:[#allocation7 + $0x30] sm:$0xff]
    %v99 = vld [vmem:[#allocation7 + $0x38] sm:$0xff]
    %v100 = vlaneseq
    %v101 = vshrl.u32 %v100, 7
    %v102 = vsub.s32 0, %v101
    %v103 = vrot.slane %v55, %v102
    %v105 = vsel %vm57, %v91, 0
    %107 = vmatprep.subr.mxu0 0.0
    %108 = vmatpush1.msra.mxu0 %v92
    %109 = vmatprep.subr.mxu0 0.0
    %110 = vmatpush1.msra.mxu0 %v93
    %111 = vmatprep.subr.mxu0 0.0
    %112 = vmatpush1.msra.mxu0 %v94
    %113 = vmatprep.subr.mxu0 0.0
    %114 = vmatpush1.msra.mxu0 %v95
    %115 = vmatprep.subr.mxu0 0.0
    %116 = vmatpush1.msra.mxu0 %v96
    %117 = vmatprep.subr.mxu0 0.0
    %118 = vmatpush1.msra.mxu0 %v97
    %119 = vmatprep.subr.mxu0 0.0
    %120 = vmatpush1.msra.mxu0 %v98
    %121 = vmatprep.subr.mxu0 0.0
    %122 = vmatpush1.msra.mxu0 %v99
    %123 = vmatprep.subr.mxu0 0.0
    %124 = vmatpush1.msra.mxu0 0.0
    %125 = vmatprep.subr.mxu0 0.0
    %126 = vmatpush1.msra.mxu0 0.0
    %127 = vmatprep.subr.mxu0 0.0
    %128 = vmatpush1.msra.mxu0 0.0
    %129 = vmatprep.subr.mxu0 0.0
    %130 = vmatpush1.msra.mxu0 0.0
    %131 = vmatprep.subr.mxu0 0.0
    %132 = vmatpush1.msra.mxu0 0.0
    %133 = vmatprep.subr.mxu0 0.0
    %134 = vmatpush1.msra.mxu0 0.0
    %135 = vmatprep.subr.mxu0 0.0
    %136 = vmatpush1.msra.mxu0 0.0
    %137 = vmatprep.subr.mxu0 0.0
    %138 = vmatpush1.msra.mxu0 0.0
    %139 = vmatprep.subr.mxu0 0.0
    %140 = vmatpush1.msra.mxu0 0.0
    %141 = vmatprep.subr.mxu0 0.0
    %142 = vmatpush1.msra.mxu0 0.0
    %143 = vmatprep.subr.mxu0 0.0
    %144 = vmatpush1.msra.mxu0 0.0
    %145 = vmatprep.subr.mxu0 0.0
    %146 = vmatpush1.msra.mxu0 0.0
    %147 = vmatprep.subr.mxu0 0.0
    %148 = vmatpush1.msra.mxu0 0.0
    %149 = vmatprep.subr.mxu0 0.0
    %150 = vmatpush1.msra.mxu0 0.0
    %151 = vmatprep.subr.mxu0 0.0
    %152 = vmatpush1.msra.mxu0 0.0
    %153 = vmatprep.subr.mxu0 0.0
    %154 = vmatpush1.msra.mxu0 0.0
    %155 = vmatprep.subr.mxu0 0.0
    %156 = vmatpush1.msra.mxu0 0.0
    %157 = vmatprep.subr.mxu0 0.0
    %158 = vmatpush1.msra.mxu0 0.0
    %159 = vmatprep.subr.mxu0 0.0
    %160 = vmatpush1.msra.mxu0 0.0
    %161 = vmatprep.subr.mxu0 0.0
    %162 = vmatpush1.msra.mxu0 0.0
    %163 = vmatprep.subr.mxu0 0.0
    %164 = vmatpush1.msra.mxu0 0.0
    %165 = vmatprep.subr.mxu0 0.0
    %166 = vmatpush1.msra.mxu0 0.0
    %167 = vmatprep.subr.mxu0 0.0
    %168 = vmatpush1.msra.mxu0 0.0
    %169 = vmatprep.subr.mxu0 0.0
    %170 = vmatpush1.msra.mxu0 0.0
    %171 = vmatprep.mubr.f32.mxu0 0.0
    %172 = vmatmul.mubr.f32.gmra.mrb[0].mxu0 %v105
    %v173 = vpop.f32.mrb[0].mxu0
    %v174 = vadd.f32 %v103, %v173
    %v175 = vpop.f32.mrb[0].mxu0
    %176 = vdwg.mxu0
    %v177 = vmax.f32 %v174, 0.0
    %v178 = vld [vmem:[#allocation7 + $0x40] sm:$0xff]
    %v179 = vld [vmem:[#allocation7 + $0x48] sm:$0xff]
    %v180 = vld [vmem:[#allocation7 + $0x50] sm:$0xff]
    %v181 = vld [vmem:[#allocation7 + $0x58] sm:$0xff]
    %v182 = vld [vmem:[#allocation7 + $0x60] sm:$0xff]
    %v183 = vld [vmem:[#allocation7 + $0x68] sm:$0xff]
    %v184 = vld [vmem:[#allocation7 + $0x70] sm:$0xff]
    %v185 = vld [vmem:[#allocation7 + $0x78] sm:$0xff]
    %v186 = vld [vmem:[#allocation7 + $0x80] sm:$0xff]
    %v187 = vld [vmem:[#allocation7 + $0x88] sm:$0xff]
    %v188 = vld [vmem:[#allocation7 + $0x90] sm:$0xff]
    %v189 = vld [vmem:[#allocation7 + $0x98] sm:$0xff]
    %v190 = vld [vmem:[#allocation7 + $0xa0] sm:$0xff]
    %v191 = vld [vmem:[#allocation7 + $0xa8] sm:$0xff]
    %v192 = vld [vmem:[#allocation7 + $0xb0] sm:$0xff]
    %v193 = vld [vmem:[#allocation7 + $0xb8] sm:$0xff]
    %v194 = vlaneseq
    %v195 = vshrl.u32 %v194, 7
    %v196 = vsub.s32 0, %v195
    %v197 = vrot.slane %v56, %v196
    %198 = vmatprep.subr.mxu0 0.0
    %199 = vmatpush1.msra.mxu0 %v178
    %200 = vmatprep.subr.mxu0 0.0
    %201 = vmatpush1.msra.mxu0 %v179
    %202 = vmatprep.subr.mxu0 0.0
    %203 = vmatpush1.msra.mxu0 %v180
    %204 = vmatprep.subr.mxu0 0.0
    %205 = vmatpush1.msra.mxu0 %v181
    %206 = vmatprep.subr.mxu0 0.0
    %207 = vmatpush1.msra.mxu0 %v182
    %208 = vmatprep.subr.mxu0 0.0
    %209 = vmatpush1.msra.mxu0 %v183
    %210 = vmatprep.subr.mxu0 0.0
    %211 = vmatpush1.msra.mxu0 %v184
    %212 = vmatprep.subr.mxu0 0.0
    %213 = vmatpush1.msra.mxu0 %v185
    %214 = vmatprep.subr.mxu0 0.0
    %215 = vmatpush1.msra.mxu0 %v186
    %216 = vmatprep.subr.mxu0 0.0
    %217 = vmatpush1.msra.mxu0 %v187
    %218 = vmatprep.subr.mxu0 0.0
    %219 = vmatpush1.msra.mxu0 %v188
    %220 = vmatprep.subr.mxu0 0.0
    %221 = vmatpush1.msra.mxu0 %v189
    %222 = vmatprep.subr.mxu0 0.0
    %223 = vmatpush1.msra.mxu0 %v190
    %224 = vmatprep.subr.mxu0 0.0
    %225 = vmatpush1.msra.mxu0 %v191
    %226 = vmatprep.subr.mxu0 0.0
    %227 = vmatpush1.msra.mxu0 %v192
    %228 = vmatprep.subr.mxu0 0.0
    %229 = vmatpush1.msra.mxu0 %v193
    %230 = vmatprep.subr.mxu0 0.0
    %231 = vmatpush1.msra.mxu0 0.0
    %232 = vmatprep.subr.mxu0 0.0
    %233 = vmatpush1.msra.mxu0 0.0
    %234 = vmatprep.subr.mxu0 0.0
    %235 = vmatpush1.msra.mxu0 0.0
    %236 = vmatprep.subr.mxu0 0.0
    %237 = vmatpush1.msra.mxu0 0.0
    %238 = vmatprep.subr.mxu0 0.0
    %239 = vmatpush1.msra.mxu0 0.0
    %240 = vmatprep.subr.mxu0 0.0
    %241 = vmatpush1.msra.mxu0 0.0
    %242 = vmatprep.subr.mxu0 0.0
    %243 = vmatpush1.msra.mxu0 0.0
    %244 = vmatprep.subr.mxu0 0.0
    %245 = vmatpush1.msra.mxu0 0.0
    %246 = vmatprep.subr.mxu0 0.0
    %247 = vmatpush1.msra.mxu0 0.0
    %248 = vmatprep.subr.mxu0 0.0
    %249 = vmatpush1.msra.mxu0 0.0
    %250 = vmatprep.subr.mxu0 0.0
    %251 = vmatpush1.msra.mxu0 0.0
    %252 = vmatprep.subr.mxu0 0.0
    %253 = vmatpush1.msra.mxu0 0.0
    %254 = vmatprep.subr.mxu0 0.0
    %255 = vmatpush1.msra.mxu0 0.0
    %256 = vmatprep.subr.mxu0 0.0
    %257 = vmatpush1.msra.mxu0 0.0
    %258 = vmatprep.subr.mxu0 0.0
    %259 = vmatpush1.msra.mxu0 0.0
    %260 = vmatprep.subr.mxu0 0.0
    %261 = vmatpush1.msra.mxu0 0.0
    %262 = vmatprep.mubr.f32.mxu0 0.0
    %263 = vmatmul.mubr.f32.gmra.mrb[0].mxu0 %v177
    %v264 = vpop.f32.mrb[0].mxu0
    %v265 = vadd.f32 %v197, %v264
    %v266 = vpop.f32.mrb[0].mxu0
    %267 = vdwg.mxu0
    %268 = vst [vmem:[#allocation8] sm:$0xff] %v265
    // Predicated region
    $region26: #{tpu_custom_call.1} parent=1 // pred_check
      _
    $region27: #{tpu_custom_call.1} parent=1 // pred_check_branch
      %270 = sbr.rel (0) target = $region29
    $region28: #{tpu_custom_call.1} parent=1 // pred_region
      %s272 = ssub.s32 128, 128
      %273 = vsyncadd [#allocation4], %s272
      %s275 = sshll.u32 [#allocation8], 4
      %s276 = int_to_ptr.vmem [resolvable:$true] %s275
      %278 = dma.vmem_to_hbm [thread:$0]  %s276, 128, %s3, [#allocation4]
    $region29: #{tpu_custom_call.1} parent=1 // pred_fallthru
      _
    // Predicated region
    $region30: #{tpu_custom_call.1} parent=1 // pred_check
      _
    $region31: #{tpu_custom_call.1} parent=1 // pred_check_branch
      %280 = sbr.rel (0) target = $region33
    $region32: #{tpu_custom_call.1} parent=1 // pred_region
      %281 = dma.done [#allocation4], 128
    $region33: #{tpu_custom_call.1} parent=1 // pred_fallthru
      _
    %282 = vsyncpa [#allocation3], 1
    %283 = vsyncpa [#allocation6], 1
    %284 = vsyncpa [#allocation4], 1

</llo_original>
